<compile_context>
chip_gen: v7x
topology: tpu7x:2x2x1
jax: 0.10.0
libtpu: 0.0.40
codegen_flags: <defaults>
</compile_context>

<pallas_src>
import jax
import jax.numpy as jnp
from jax.experimental import pallas as pl
from jax.experimental.pallas import tpu as pltpu

_EPS = 1e-5


def _round_up(x, mult):
    return ((x + mult - 1) // mult) * mult


def _device_kind():
    try:
        return jax.devices()[0].device_kind.lower()
    except Exception:  # pragma: no cover - defensive
        return ""


def _default_compute_dtype():
    kind = _device_kind()
    if "v6" in kind or "v7" in kind:
        return jnp.bfloat16      # bf16-native VPU/MXU: ~2x VALU, half VMEM
    return jnp.float32           # v5e & unknown: no bf16 VPU path


def _default_vmem_limit():
    kind = _device_kind()
    if "v7" in kind:
        return 48 * 1024 * 1024  # v7x has only 64 MiB physical VMEM
    return 64 * 1024 * 1024      # v5e / v6e: 128 MiB physical


def _stats_kernel(x_ref, w1_ref, b1_ref, w2_ref, h2_ref, sum_ref, sumsq_ref):
    """Pass 1: conv1 + LeakyReLU + conv2; spill h2; accumulate per-channel
    sum / sumsq of h2 (f32).  No masking in the hot loop -- padded columns are
    corrected outside the kernel."""
    @pl.when(pl.program_id(1) == 0)
    def _():
        sum_ref[...] = jnp.zeros_like(sum_ref)
        sumsq_ref[...] = jnp.zeros_like(sumsq_ref)

    x = x_ref[...]                                                   # (Cin, TM) cdt
    h1 = jnp.dot(w1_ref[...], x,
                 preferred_element_type=jnp.float32).astype(x.dtype)  # (ndf, TM)
    h1 = h1 + b1_ref[...]
    h1 = jnp.where(h1 > 0, h1, 0.2 * h1)                             # LeakyReLU, cdt
    h2 = jnp.dot(w2_ref[...], h1,
                 preferred_element_type=jnp.float32)                 # (2*ndf, TM) f32
    h2_ref[...] = h2.astype(h2_ref.dtype)                            # spill in cdt

    sum_ref[...] += jnp.sum(h2, axis=1, keepdims=True)[None]         # (1, 2*ndf, 1)
    sumsq_ref[...] += jnp.sum(h2 * h2, axis=1, keepdims=True)[None]


def _apply_kernel(h2_ref, a_ref, b_ref, w3_ref, out_ref):
    """Pass 2: folded BN (a*h2 + b) + LeakyReLU + conv3 on the spilled h2."""
    h2 = h2_ref[...]                                                 # (2*ndf, TM) cdt
    h2n = a_ref[...] * h2 + b_ref[...]                               # folded BatchNorm
    h2n = jnp.where(h2n > 0, h2n, 0.2 * h2n)                         # LeakyReLU
    out = jnp.dot(w3_ref[...], h2n, preferred_element_type=jnp.float32)  # (1, TM)
    out_ref[...] = out.astype(out_ref.dtype)


def pixel_discriminator_pallas(x_nchw, params, *, tile_m=None, compute_dtype=None,
                               num_splits=2, vmem_limit_bytes=None):
    """x_nchw: (N, C, H, W) float32.  Returns (N, 1, H, W) float32.

    compute_dtype: None -> generation-aware (bf16 on v6e/v7x, f32 on v5e).
    Pass jnp.float32 explicitly for exact-semantics parity with PyTorch f32.
    """
    w1, b1, w2 = params["w1"], params["b1"], params["w2"]
    gamma, beta, w3 = params["gamma"], params["beta"], params["w3"]
    n, c, h, w = x_nchw.shape
    m = n * h * w
    ndf = w1.shape[0]
    c2 = w2.shape[0]

    cdt = _default_compute_dtype() if compute_dtype is None else compute_dtype
    vmem_limit = _default_vmem_limit() if vmem_limit_bytes is None else vmem_limit_bytes
    if tile_m is None:
        tile_m = 65536

    # NCHW -> channels-major (C, M): channels on sublanes, pixels on lanes.
    x_cm = jnp.transpose(x_nchw, (1, 0, 2, 3)).reshape(c, m).astype(cdt)
    w1_c, b1_c, w2_c, w3_c = (w1.astype(cdt), b1.astype(cdt),
                              w2.astype(cdt), w3.astype(cdt))

    tm = min(tile_m, _round_up(m, 128))           # lane-dense tile, multiple of 128
    m_pad = _round_up(m, num_splits * tm)
    tiles_per_split = m_pad // (num_splits * tm)
    pad = m_pad - m
    if pad:
        x_cm = jnp.pad(x_cm, ((0, 0), (0, pad)))

    # ---------------- Pass 1: conv1/conv2, h2 spill, BN statistics ------------
    x_spec = pl.BlockSpec((c, tm), lambda s, i: (0, s * tiles_per_split + i))
    h2_spec = pl.BlockSpec((c2, tm), lambda s, i: (0, s * tiles_per_split + i))
    acc_spec = pl.BlockSpec((1, c2, 1), lambda s, i: (s, 0, 0))

    def resident(shape):  # tiny weights: full-array block, stays resident in VMEM
        return pl.BlockSpec(shape, lambda s, i: (0, 0))

    h2_cm, psum, psumsq = pl.pallas_call(
        _stats_kernel,
        out_shape=(jax.ShapeDtypeStruct((c2, m_pad), cdt),
                   jax.ShapeDtypeStruct((num_splits, c2, 1), jnp.float32),
                   jax.ShapeDtypeStruct((num_splits, c2, 1), jnp.float32)),
        grid_spec=pltpu.PrefetchScalarGridSpec(
            num_scalar_prefetch=0, grid=(num_splits, tiles_per_split),
            in_specs=[x_spec, resident((ndf, c)), resident((ndf, 1)),
                      resident((c2, ndf))],
            out_specs=(h2_spec, acc_spec, acc_spec)),
        compiler_params=pltpu.CompilerParams(
            dimension_semantics=("parallel", "arbitrary"),
            vmem_limit_bytes=vmem_limit),
    )(x_cm, w1_c, b1_c, w2_c)

    # --------- BN fold (tiny per-channel vectors, plain JAX, f32) -------------
    sum_h2 = jnp.sum(psum, axis=0)                     # (c2, 1)
    sumsq_h2 = jnp.sum(psumsq, axis=0)
    if pad:
        # Padded x columns are zero => h2 there equals the constant column
        # c0 = w2 @ leaky_relu(b1); subtract its contribution (matches the
        # kernel's compute-dtype pipeline).
        h1_0 = jnp.where(b1_c > 0, b1_c, 0.2 * b1_c)
        c0 = jnp.dot(w2_c, h1_0, preferred_element_type=jnp.float32)  # (c2, 1)
        sum_h2 = sum_h2 - pad * c0
        sumsq_h2 = sumsq_h2 - pad * (c0 * c0)
    mean = sum_h2 / m
    # NOTE: E[x^2]-E[x]^2 in f32 can cancel for very large M / non-centered h2;
    # fine at these sizes (clamped). TODO(synk): switch to per-tile (count,mean,M2)
    # accumulation if M reaches tens of millions of pixels.
    var = jnp.maximum(sumsq_h2 / m - mean * mean, 0.0)
    a_f32 = gamma * jax.lax.rsqrt(var + _EPS)
    b_f32 = beta - mean * a_f32
    a_fold = a_f32.astype(cdt)
    b_fold = b_f32.astype(cdt)

    # ---------------- Pass 2: BN FMA + LeakyReLU + conv3 ----------------------
    out_cm = pl.pallas_call(
        _apply_kernel,
        out_shape=jax.ShapeDtypeStruct((1, m_pad), jnp.float32),
        grid_spec=pltpu.PrefetchScalarGridSpec(
            num_scalar_prefetch=0, grid=(m_pad // tm,),
            in_specs=[pl.BlockSpec((c2, tm), lambda i: (0, i)),
                      pl.BlockSpec((c2, 1), lambda i: (0, 0)),
                      pl.BlockSpec((c2, 1), lambda i: (0, 0)),
                      pl.BlockSpec((1, c2), lambda i: (0, 0))],
            out_specs=pl.BlockSpec((1, tm), lambda i: (0, i))),
        compiler_params=pltpu.CompilerParams(
            dimension_semantics=("parallel",),
            vmem_limit_bytes=vmem_limit),
    )(h2_cm, a_fold, b_fold, w3_c)

    # (1, M) -> (N, 1, H, W)
    out_cm = out_cm[:, :m]
    return jnp.transpose(out_cm.reshape(1, n, h, w), (1, 0, 2, 3))


def _reference_forward(x_nchw, params):
    """Pure-JAX f32 reference of the same forward pass (training-mode BatchNorm)."""
    n, c, h, w = x_nchw.shape
    xm = jnp.transpose(x_nchw, (1, 0, 2, 3)).reshape(c, n * h * w)   # (Cin, M)
    h1 = params["w1"] @ xm + params["b1"]
    h1 = jnp.where(h1 > 0, h1, 0.2 * h1)
    h2 = params["w2"] @ h1
    mean = jnp.mean(h2, axis=1, keepdims=True)
    var = jnp.mean((h2 - mean) ** 2, axis=1, keepdims=True)          # biased var
    h2n = (h2 - mean) * jax.lax.rsqrt(var + _EPS) * params["gamma"] + params["beta"]
    h2n = jnp.where(h2n > 0, h2n, 0.2 * h2n)
    out = params["w3"] @ h2n                                          # (1, M)
    return jnp.transpose(out.reshape(1, n, h, w), (1, 0, 2, 3))


def init_params(key, input_nc, ndf):
    """Deterministic init.  Conv weights in PyTorch (C_out, C_in) layout (1x1
    kernel dims squeezed) -- exactly the channels-major layout the kernel uses."""
    k1, k2, k3, k4 = jax.random.split(key, 4)
    w1 = jax.random.normal(k1, (ndf, input_nc), jnp.float32) * 0.1
    b1 = jax.random.normal(k2, (ndf, 1), jnp.float32) * 0.1
    w2 = jax.random.normal(k3, (2 * ndf, ndf), jnp.float32) * 0.1
    w3 = jax.random.normal(k4, (1, 2 * ndf), jnp.float32) * 0.1
    gamma = jnp.ones((2 * ndf, 1), jnp.float32)   # PyTorch BatchNorm2d init
    beta = jnp.zeros((2 * ndf, 1), jnp.float32)
    return {"w1": w1, "b1": b1, "w2": w2, "gamma": gamma, "beta": beta, "w3": w3}


if __name__ == "__main__":
    key = jax.random.PRNGKey(0)
    kx, kp = jax.random.split(key)

    N, INPUT_NC, H, W = 2, 4, 16, 16
    NDF = 8

    x = jax.random.normal(kx, (N, INPUT_NC, H, W), jnp.float32)
    params = init_params(kp, INPUT_NC, NDF)

    ref = jax.block_until_ready(_reference_forward(x, params))

    # Exact-semantics (f32 compute) parity check.
    out_f32 = jax.block_until_ready(
        pixel_discriminator_pallas(x, params, compute_dtype=jnp.float32))
    assert out_f32.shape == (N, 1, H, W), out_f32.shape
    if not jnp.allclose(out_f32, ref, rtol=1e-3, atol=1e-3):
        raise AssertionError("f32 Pallas output does not match reference")

    # Default generation-aware path (bf16 activations on v6e/v7x, f32 on v5e).
    out_auto = jax.block_until_ready(pixel_discriminator_pallas(x, params))
    assert out_auto.shape == (N, 1, H, W), out_auto.shape
    if not jnp.allclose(out_auto, ref, rtol=5e-2, atol=5e-2):
        raise AssertionError("auto-dtype Pallas output does not match reference")

    print("KERNEL_OK")
</pallas_src>

<mosaic_0001>
module attributes {stable_mosaic.version = 11 : i64} {
  func.func @_stats_kernel(%arg0: i32, %arg1: i32, %arg2: memref<4x512xf32, #tpu.memory_space<vmem>>, %arg3: memref<8x4xf32, #tpu.memory_space<vmem>>, %arg4: memref<8x1xf32, #tpu.memory_space<vmem>>, %arg5: memref<16x8xf32, #tpu.memory_space<vmem>>, %arg6: memref<16x512xf32, #tpu.memory_space<vmem>>, %arg7: memref<1x16x1xf32, #tpu.memory_space<vmem>>, %arg8: memref<1x16x1xf32, #tpu.memory_space<vmem>>) attributes {dimension_semantics = [#tpu.dimension_semantics<parallel>, #tpu.dimension_semantics<arbitrary>], iteration_bounds = array<i64: 2, 1>, scalar_prefetch = 0 : i64, scratch_operands = 0 : i64, tpu.core_type = #tpu.core_type<tc>, window_params = [{transform_indices = @transform_0, window_bounds = array<i64: 4, 512>}, {pipeline_mode = #tpu.pipeline_mode<synchronous>, transform_indices = @transform_1, window_bounds = array<i64: 8, 4>}, {pipeline_mode = #tpu.pipeline_mode<synchronous>, transform_indices = @transform_2, window_bounds = array<i64: 8, 1>}, {pipeline_mode = #tpu.pipeline_mode<synchronous>, transform_indices = @transform_3, window_bounds = array<i64: 16, 8>}, {transform_indices = @transform_4, window_bounds = array<i64: 16, 512>}, {transform_indices = @transform_5, window_bounds = array<i64: 1, 16, 1>}, {transform_indices = @transform_6, window_bounds = array<i64: 1, 16, 1>}]} {
    %c0_i32 = arith.constant 0 : i32
    %0 = arith.cmpi eq, %arg1, %c0_i32 : i32
    %1 = arith.extui %0 : i1 to i32
    %c0_i32_0 = arith.constant 0 : i32
    %2 = arith.cmpi ne, %1, %c0_i32_0 : i32
    scf.if %2 {
      %cst_27 = arith.constant 0.000000e+00 : f32
      %30 = vector.broadcast %cst_27 : f32 to vector<1x16x1xf32>
      %c0_28 = arith.constant 0 : index
      %c0_29 = arith.constant 0 : index
      %c0_30 = arith.constant 0 : index
      %31 = vector.load %arg7[%c0_28, %c0_29, %c0_30] : memref<1x16x1xf32, #tpu.memory_space<vmem>>, vector<1x16x1xf32>
      tpu.vector_store %arg7[%c0_28, %c0_29, %c0_30], %30 {strides = array<i32>} : memref<1x16x1xf32, #tpu.memory_space<vmem>>, vector<1x16x1xf32>,
      %cst_31 = arith.constant 0.000000e+00 : f32
      %32 = vector.broadcast %cst_31 : f32 to vector<1x16x1xf32>
      %c0_32 = arith.constant 0 : index
      %c0_33 = arith.constant 0 : index
      %c0_34 = arith.constant 0 : index
      %33 = vector.load %arg8[%c0_32, %c0_33, %c0_34] : memref<1x16x1xf32, #tpu.memory_space<vmem>>, vector<1x16x1xf32>
      tpu.vector_store %arg8[%c0_32, %c0_33, %c0_34], %32 {strides = array<i32>} : memref<1x16x1xf32, #tpu.memory_space<vmem>>, vector<1x16x1xf32>,
    } else {
    }
    %c0 = arith.constant 0 : index
    %c0_1 = arith.constant 0 : index
    %3 = vector.load %arg2[%c0, %c0_1] : memref<4x512xf32, #tpu.memory_space<vmem>>, vector<4x512xf32>
    %c0_2 = arith.constant 0 : index
    %c0_3 = arith.constant 0 : index
    %4 = vector.load %arg3[%c0_2, %c0_3] : memref<8x4xf32, #tpu.memory_space<vmem>>, vector<8x4xf32>
    %cst = arith.constant dense<0.000000e+00> : vector<8x512xf32>
    %5 = tpu.matmul %4, %3, %cst {dimension_numbers = #tpu.dot_dimension_numbers<[1], [0], [0], [1], [0, 0, 1, 1], [], []>} : vector<8x4xf32>, vector<4x512xf32>, vector<8x512xf32> -> vector<8x512xf32>
    %c0_4 = arith.constant 0 : index
    %c0_5 = arith.constant 0 : index
    %6 = vector.load %arg4[%c0_4, %c0_5] : memref<8x1xf32, #tpu.memory_space<vmem>>, vector<8x1xf32>
    %7 = vector.broadcast %6 : vector<8x1xf32> to vector<8x512xf32>
    %8 = arith.addf %5, %7 : vector<8x512xf32>
    %cst_6 = arith.constant 0.000000e+00 : f32
    %9 = vector.broadcast %cst_6 : f32 to vector<8x512xf32>
    %10 = arith.cmpf ogt, %8, %9 : vector<8x512xf32>
    %cst_7 = arith.constant 2.000000e-01 : f32
    %11 = vector.broadcast %cst_7 : f32 to vector<8x512xf32>
    %12 = arith.mulf %11, %8 : vector<8x512xf32>
    %13 = arith.select %10, %8, %12 : vector<8x512xi1>, vector<8x512xf32>
    %c0_8 = arith.constant 0 : index
    %c0_9 = arith.constant 0 : index
    %14 = vector.load %arg5[%c0_8, %c0_9] : memref<16x8xf32, #tpu.memory_space<vmem>>, vector<16x8xf32>
    %cst_10 = arith.constant dense<0.000000e+00> : vector<16x512xf32>
    %15 = tpu.matmul %14, %13, %cst_10 {dimension_numbers = #tpu.dot_dimension_numbers<[1], [0], [0], [1], [0, 0, 1, 1], [], []>} : vector<16x8xf32>, vector<8x512xf32>, vector<16x512xf32> -> vector<16x512xf32>
    %c0_11 = arith.constant 0 : index
    %c0_12 = arith.constant 0 : index
    %16 = vector.load %arg6[%c0_11, %c0_12] : memref<16x512xf32, #tpu.memory_space<vmem>>, vector<16x512xf32>
    tpu.vector_store %arg6[%c0_11, %c0_12], %15 {strides = array<i32>} : memref<16x512xf32, #tpu.memory_space<vmem>>, vector<16x512xf32>,
    %c0_13 = arith.constant 0 : index
    %c0_14 = arith.constant 0 : index
    %c0_15 = arith.constant 0 : index
    %17 = vector.load %arg7[%c0_13, %c0_14, %c0_15] : memref<1x16x1xf32, #tpu.memory_space<vmem>>, vector<1x16x1xf32>
    %cst_16 = arith.constant dense<0.000000e+00> : vector<16xf32>
    %18 = vector.multi_reduction <add>, %15, %cst_16 [1] : vector<16x512xf32> to vector<16xf32>
    %19 = vector.shape_cast %18 : vector<16xf32> to vector<16x1xf32>
    %20 = vector.shape_cast %19 : vector<16x1xf32> to vector<1x16x1xf32>
    %21 = arith.addf %17, %20 : vector<1x16x1xf32>
    %c0_17 = arith.constant 0 : index
    %c0_18 = arith.constant 0 : index
    %c0_19 = arith.constant 0 : index
    %22 = vector.load %arg7[%c0_17, %c0_18, %c0_19] : memref<1x16x1xf32, #tpu.memory_space<vmem>>, vector<1x16x1xf32>
    tpu.vector_store %arg7[%c0_17, %c0_18, %c0_19], %21 {strides = array<i32>} : memref<1x16x1xf32, #tpu.memory_space<vmem>>, vector<1x16x1xf32>,
    %c0_20 = arith.constant 0 : index
    %c0_21 = arith.constant 0 : index
    %c0_22 = arith.constant 0 : index
    %23 = vector.load %arg8[%c0_20, %c0_21, %c0_22] : memref<1x16x1xf32, #tpu.memory_space<vmem>>, vector<1x16x1xf32>
    %24 = arith.mulf %15, %15 : vector<16x512xf32>
    %cst_23 = arith.constant dense<0.000000e+00> : vector<16xf32>
    %25 = vector.multi_reduction <add>, %24, %cst_23 [1] : vector<16x512xf32> to vector<16xf32>
    %26 = vector.shape_cast %25 : vector<16xf32> to vector<16x1xf32>
    %27 = vector.shape_cast %26 : vector<16x1xf32> to vector<1x16x1xf32>
    %28 = arith.addf %23, %27 : vector<1x16x1xf32>
    %c0_24 = arith.constant 0 : index
    %c0_25 = arith.constant 0 : index
    %c0_26 = arith.constant 0 : index
    %29 = vector.load %arg8[%c0_24, %c0_25, %c0_26] : memref<1x16x1xf32, #tpu.memory_space<vmem>>, vector<1x16x1xf32>
    tpu.vector_store %arg8[%c0_24, %c0_25, %c0_26], %28 {strides = array<i32>} : memref<1x16x1xf32, #tpu.memory_space<vmem>>, vector<1x16x1xf32>,
    return
  }
  func.func @transform_0(%arg0: i32, %arg1: i32) -> (i32, i32) {
    %c1_i32 = arith.constant 1 : i32
    %0 = arith.muli %arg0, %c1_i32 : i32
    %1 = arith.addi %0, %arg1 : i32
    %c0_i32 = arith.constant 0 : i32
    %c0_i32_0 = arith.constant 0 : i32
    return %c0_i32, %1 : i32, i32
  }
  func.func @transform_1(%arg0: i32, %arg1: i32) -> (i32, i32) {
    %c0_i32 = arith.constant 0 : i32
    %c0_i32_0 = arith.constant 0 : i32
    %c0_i32_1 = arith.constant 0 : i32
    return %c0_i32, %c0_i32_0 : i32, i32
  }
  func.func @transform_2(%arg0: i32, %arg1: i32) -> (i32, i32) {
    %c0_i32 = arith.constant 0 : i32
    %c0_i32_0 = arith.constant 0 : i32
    %c0_i32_1 = arith.constant 0 : i32
    return %c0_i32, %c0_i32_0 : i32, i32
  }
  func.func @transform_3(%arg0: i32, %arg1: i32) -> (i32, i32) {
    %c0_i32 = arith.constant 0 : i32
    %c0_i32_0 = arith.constant 0 : i32
    %c0_i32_1 = arith.constant 0 : i32
    return %c0_i32, %c0_i32_0 : i32, i32
  }
  func.func @transform_4(%arg0: i32, %arg1: i32) -> (i32, i32) {
    %c1_i32 = arith.constant 1 : i32
    %0 = arith.muli %arg0, %c1_i32 : i32
    %1 = arith.addi %0, %arg1 : i32
    %c0_i32 = arith.constant 0 : i32
    %c0_i32_0 = arith.constant 0 : i32
    return %c0_i32, %1 : i32, i32
  }
  func.func @transform_5(%arg0: i32, %arg1: i32) -> (i32, i32, i32) {
    %c0_i32 = arith.constant 0 : i32
    %c0_i32_0 = arith.constant 0 : i32
    %c0_i32_1 = arith.constant 0 : i32
    return %arg0, %c0_i32, %c0_i32_0 : i32, i32, i32
  }
  func.func @transform_6(%arg0: i32, %arg1: i32) -> (i32, i32, i32) {
    %c0_i32 = arith.constant 0 : i32
    %c0_i32_0 = arith.constant 0 : i32
    %c0_i32_1 = arith.constant 0 : i32
    return %arg0, %c0_i32, %c0_i32_0 : i32, i32, i32
  }
}

</mosaic_0001>

<llo_original>
// kernel: tpu_custom_call.1
$region0: #{tpu_custom_call.1}
  #allocation0 [shape = 'u32[]', space=smem, size = 0x4, offset = 0x4, fixed_abs, tag = 'smem constant byte address 0x4 - core index']
  #allocation1 [shape = 'u32[144,128]{1,0:T(1,128)}', space=vmem, size = 0x12000, scoped, tag = 'internal scratch']
  %s0 = inlined_call_operand.hbm [shape: f32[4,1024], index: 0, kind: input, shape index: {}]
  %s1 = inlined_call_operand.hbm [shape: f32[8,4], index: 1, kind: input, shape index: {}]
  %s2 = inlined_call_operand.hbm [shape: f32[8,1], index: 2, kind: input, shape index: {}]
  %s3 = inlined_call_operand.hbm [shape: f32[16,8], index: 3, kind: input, shape index: {}]
  %s4 = inlined_call_operand.hbm [shape: f32[16,1024], index: 4, kind: output, shape index: {0}]
  %s5 = inlined_call_operand.hbm [shape: f32[2,16,1], index: 5, kind: output, shape index: {1}]
  %s6 = inlined_call_operand.hbm [shape: f32[2,16,1], index: 6, kind: output, shape index: {2}]
  %7 = xla_tuple %s4, %s5, %s6
  %s8 = sld [smem:[#allocation0]]
  $region85: #{tpu_custom_call.1} parent=0
    _
  %s10 = ssub.s32 1, %s8
  %s11 = scalar_select 0, %s10, %s8
  $region1: #{tpu_custom_call.1} parent=0
    #allocation2 [shape = 'u8[16384]{0}', space=vmem, size = 0x4000, scoped, tag = 'input window, operand 0']
    #allocation3 [shape = 's32[2]{0}', space=sflag, size = 0x8, scoped, tag = 'scoped memory for tpu_custom_call.1']
    #allocation4 [shape = 's32[2]{0}', space=sflag, size = 0x8, scoped, tag = 'scoped memory for tpu_custom_call.1']
    #allocation5 [shape = 'u8[4096]{0}', space=vmem, size = 0x1000, scoped, tag = 'input window, operand 1, single buffered']
    #allocation6 [shape = 's32[1]{0}', space=sflag, size = 0x4, scoped, tag = 'scoped memory for tpu_custom_call.1']
    #allocation7 [shape = 'u8[4096]{0}', space=vmem, size = 0x1000, scoped, tag = 'input window, operand 2, single buffered']
    #allocation8 [shape = 'u8[8192]{0}', space=vmem, size = 0x2000, scoped, tag = 'input window, operand 3, single buffered']
    #allocation9 [shape = 's32[1]{0}', space=sflag, size = 0x4, scoped, tag = 'scoped memory for tpu_custom_call.1']
    #allocation10 [shape = 'u8[65536]{0}', space=vmem, size = 0x10000, scoped, tag = 'output window, operand 0']
    #allocation11 [shape = 'u8[16384]{0}', space=vmem, size = 0x4000, scoped, tag = 'output window, operand 1']
    #allocation12 [shape = 's32[2]{0}', space=sflag, size = 0x8, scoped, tag = 'scoped memory for tpu_custom_call.1']
    #allocation13 [shape = 'u8[16384]{0}', space=vmem, size = 0x4000, scoped, tag = 'output window, operand 2']
    %12 = vsyncpa [#allocation3], 0
    %s13 = scalar_lea.sflag [#allocation3], 1
    %14 = vsyncpa %s13, 0
    %15 = vsyncpa [#allocation6], 0
    %16 = vsyncpa [#allocation9], 0
    %17 = vsyncpa [#allocation4], 0
    %s18 = scalar_lea.sflag [#allocation4], 1
    %19 = vsyncpa %s18, 0
    %20 = vsyncpa [#allocation12], 0
    %s21 = scalar_lea.sflag [#allocation12], 1
    %22 = vsyncpa %s21, 0
    loop: start=0, step=1, limit=4
    $region2: #{tpu_custom_call.1} parent=1 // loop_pre_header
      _
    $region3: #{tpu_custom_call.1} parent=1 // loop_header
      %s24 = sphi 0, %s28
      %p25 = scmp.ge.s32.totalorder %s24, 4
      %s31 = sphi 0, %s43
      %s32 = sphi 0, %s39
      %s33 = sphi 0, %s31
      %s34 = sphi 0, %s32
      %s35 = sphi 0, %s33
      %s36 = sphi 0, %s34
      %s48 = sphi 0, %s50
      %s51 = sphi 0, %s48
      %s52 = sphi 0, %s51
      %s68 = sphi 0, %s52
      %s72 = sphi 0, %s72
      %s74 = sphi 0, %s72
      %s75 = sphi 0, %s74
      %s89 = sphi 0, %s75
      %s93 = sphi 0, %s93
      %s95 = sphi 0, %s93
      %s96 = sphi 0, %s95
      %s110 = sphi 0, %s96
      %s114 = sphi 0, %s114
      %s116 = sphi 0, %s114
      %s117 = sphi 0, %s116
      %s131 = sphi 0, %s117
      %s139 = sphi 0, %s141
      %s142 = sphi 0, %s139
      %s143 = sphi 0, %s142
      %s159 = sphi 0, %s143
      %s165 = sphi 0, %s167
      %s168 = sphi 0, %s165
      %s169 = sphi 0, %s168
      %s185 = sphi 0, %s169
      %s191 = sphi 0, %s193
      %s194 = sphi 0, %s191
      %s195 = sphi 0, %s194
      %s211 = sphi 0, %s195
    $region4: #{tpu_custom_call.1} parent=1 // loop_header_branch
      %27 = sbr.rel (%p25) target = $region8
    $region5: #{tpu_custom_call.1} parent=1 // loop_body
      %s29 = ssub.s32 %s24, 1
      %s30 = ssub.s32 %s24, 2
      %s37 = sadd.s32 1, %s32
      %p38 = scmp.ge.s32.totalorder %s37, 1
      %s39 = scalar_select %p38, 0, %s37
      %s40 = sadd.s32 1, %s31
      %s41 = scalar_select %p38, %s40, %s31
      %p42 = scmp.ge.s32.totalorder %s41, 2
      %s43 = scalar_select %p42, 0, %s41
      %s44 = sadd.s32 %s31, %s32
      %s45 = sadd.s32 %s43, %s39
      %s46 = ssub.s32 %s44, %s45
      %p47 = scmp.eq.s32.totalorder %s46, 0
      %s49 = sadd.s32 %s48, 1
      %s50 = scalar_select %p47, %s48, %s49
      %p53 = pneg %p47
      %p54 = scmp.eq.s32.totalorder %s24, 1
      %p55 = por %p53, %p54
      %p56 = scmp.ne.s32.totalorder %s48, %s51
      %p57 = scmp.eq.s32.totalorder %s24, 0
      %p58 = por %p56, %p57
      %p59 = scmp.ne.s32.totalorder %s48, %s51
      %p60 = scmp.eq.s32.totalorder %s29, 1
      %p61 = por %p59, %p60
      %p62 = scmp.ne.s32.totalorder %s51, %s52
      %p63 = scmp.eq.s32.totalorder %s29, 0
      %p64 = por %p62, %p63
      %p65 = scmp.ne.s32.totalorder %s51, %s52
      %p66 = scmp.eq.s32.totalorder %s30, 1
      %p67 = por %p65, %p66
      %p69 = scmp.ne.s32.totalorder %s52, %s68
      %p70 = scmp.eq.s32.totalorder %s30, 0
      %p71 = por %p69, %p70
      %s73 = sadd.s32 %s72, 1
      %p76 = scmp.eq.s32.totalorder %s24, 1
      %p77 = scmp.ne.s32.totalorder %s72, %s74
      %p78 = scmp.eq.s32.totalorder %s24, 0
      %p79 = por %p77, %p78
      %p80 = scmp.ne.s32.totalorder %s72, %s74
      %p81 = scmp.eq.s32.totalorder %s29, 1
      %p82 = por %p80, %p81
      %p83 = scmp.ne.s32.totalorder %s74, %s75
      %p84 = scmp.eq.s32.totalorder %s29, 0
      %p85 = por %p83, %p84
      %p86 = scmp.ne.s32.totalorder %s74, %s75
      %p87 = scmp.eq.s32.totalorder %s30, 1
      %p88 = por %p86, %p87
      %p90 = scmp.ne.s32.totalorder %s75, %s89
      %p91 = scmp.eq.s32.totalorder %s30, 0
      %p92 = por %p90, %p91
      %s94 = sadd.s32 %s93, 1
      %p97 = scmp.eq.s32.totalorder %s24, 1
      %p98 = scmp.ne.s32.totalorder %s93, %s95
      %p99 = scmp.eq.s32.totalorder %s24, 0
      %p100 = por %p98, %p99
      %p101 = scmp.ne.s32.totalorder %s93, %s95
      %p102 = scmp.eq.s32.totalorder %s29, 1
      %p103 = por %p101, %p102
      %p104 = scmp.ne.s32.totalorder %s95, %s96
      %p105 = scmp.eq.s32.totalorder %s29, 0
      %p106 = por %p104, %p105
      %p107 = scmp.ne.s32.totalorder %s95, %s96
      %p108 = scmp.eq.s32.totalorder %s30, 1
      %p109 = por %p107, %p108
      %p111 = scmp.ne.s32.totalorder %s96, %s110
      %p112 = scmp.eq.s32.totalorder %s30, 0
      %p113 = por %p111, %p112
      %s115 = sadd.s32 %s114, 1
      %p118 = scmp.eq.s32.totalorder %s24, 1
      %p119 = scmp.ne.s32.totalorder %s114, %s116
      %p120 = scmp.eq.s32.totalorder %s24, 0
      %p121 = por %p119, %p120
      %p122 = scmp.ne.s32.totalorder %s114, %s116
      %p123 = scmp.eq.s32.totalorder %s29, 1
      %p124 = por %p122, %p123
      %p125 = scmp.ne.s32.totalorder %s116, %s117
      %p126 = scmp.eq.s32.totalorder %s29, 0
      %p127 = por %p125, %p126
      %p128 = scmp.ne.s32.totalorder %s116, %s117
      %p129 = scmp.eq.s32.totalorder %s30, 1
      %p130 = por %p128, %p129
      %p132 = scmp.ne.s32.totalorder %s117, %s131
      %p133 = scmp.eq.s32.totalorder %s30, 0
      %p134 = por %p132, %p133
      %s135 = sadd.s32 %s31, %s32
      %s136 = sadd.s32 %s43, %s39
      %s137 = ssub.s32 %s135, %s136
      %p138 = scmp.eq.s32.totalorder %s137, 0
      %s140 = sadd.s32 %s139, 1
      %s141 = scalar_select %p138, %s139, %s140
      %p144 = pneg %p138
      %p145 = scmp.eq.s32.totalorder %s24, 1
      %p146 = por %p144, %p145
      %p147 = scmp.ne.s32.totalorder %s139, %s142
      %p148 = scmp.eq.s32.totalorder %s24, 0
      %p149 = por %p147, %p148
      %p150 = scmp.ne.s32.totalorder %s139, %s142
      %p151 = scmp.eq.s32.totalorder %s29, 1
      %p152 = por %p150, %p151
      %p153 = scmp.ne.s32.totalorder %s142, %s143
      %p154 = scmp.eq.s32.totalorder %s29, 0
      %p155 = por %p153, %p154
      %p156 = scmp.ne.s32.totalorder %s142, %s143
      %p157 = scmp.eq.s32.totalorder %s30, 1
      %p158 = por %p156, %p157
      %p160 = scmp.ne.s32.totalorder %s143, %s159
      %p161 = scmp.eq.s32.totalorder %s30, 0
      %p162 = por %p160, %p161
      %s163 = ssub.s32 %s31, %s43
      %p164 = scmp.eq.s32.totalorder %s163, 0
      %s166 = sadd.s32 %s165, 1
      %s167 = scalar_select %p164, %s165, %s166
      %p170 = pneg %p164
      %p171 = scmp.eq.s32.totalorder %s24, 1
      %p172 = por %p170, %p171
      %p173 = scmp.ne.s32.totalorder %s165, %s168
      %p174 = scmp.eq.s32.totalorder %s24, 0
      %p175 = por %p173, %p174
      %p176 = scmp.ne.s32.totalorder %s165, %s168
      %p177 = scmp.eq.s32.totalorder %s29, 1
      %p178 = por %p176, %p177
      %p179 = scmp.ne.s32.totalorder %s168, %s169
      %p180 = scmp.eq.s32.totalorder %s29, 0
      %p181 = por %p179, %p180
      %p182 = scmp.ne.s32.totalorder %s168, %s169
      %p183 = scmp.eq.s32.totalorder %s30, 1
      %p184 = por %p182, %p183
      %p186 = scmp.ne.s32.totalorder %s169, %s185
      %p187 = scmp.eq.s32.totalorder %s30, 0
      %p188 = por %p186, %p187
      %s189 = ssub.s32 %s31, %s43
      %p190 = scmp.eq.s32.totalorder %s189, 0
      %s192 = sadd.s32 %s191, 1
      %s193 = scalar_select %p190, %s191, %s192
      %p196 = pneg %p190
      %p197 = scmp.eq.s32.totalorder %s24, 1
      %p198 = por %p196, %p197
      %p199 = scmp.ne.s32.totalorder %s191, %s194
      %p200 = scmp.eq.s32.totalorder %s24, 0
      %p201 = por %p199, %p200
      %p202 = scmp.ne.s32.totalorder %s191, %s194
      %p203 = scmp.eq.s32.totalorder %s29, 1
      %p204 = por %p202, %p203
      %p205 = scmp.ne.s32.totalorder %s194, %s195
      %p206 = scmp.eq.s32.totalorder %s29, 0
      %p207 = por %p205, %p206
      %p208 = scmp.ne.s32.totalorder %s194, %s195
      %p209 = scmp.eq.s32.totalorder %s30, 1
      %p210 = por %p208, %p209
      %p212 = scmp.ne.s32.totalorder %s195, %s211
      %p213 = scmp.eq.s32.totalorder %s30, 0
      %p214 = por %p212, %p213
      %p215 = scmp.le.s32.totalorder 1, %s24
      %p216 = scmp.lt.s32.totalorder %s24, 3
      %p217 = pnand %p215, %p216
      %p218 = pneg %p217
      // Predicated region
      $region9: #{tpu_custom_call.1} parent=5 // pred_check
        _
      $region10: #{tpu_custom_call.1} parent=5 // pred_check_branch
        %220 = sbr.rel (%p217) target = $region12
      $region11: #{tpu_custom_call.1} parent=5 // pred_region
        %s221 = ssub.s32 %s24, 1
        // Predicated region
        $region13: #{tpu_custom_call.1} parent=11 // pred_check
          %p222 = pneg %p85
        $region14: #{tpu_custom_call.1} parent=11 // pred_check_branch
          %224 = sbr.rel (%p222) target = $region16
        $region15: #{tpu_custom_call.1} parent=11 // pred_region
          %s226 = ssub.s32 128, 128
          %227 = vsyncadd [#allocation6], %s226
          %s229 = sshll.u32 [#allocation5], 4
          %s230 = int_to_ptr.vmem [resolvable:$true] %s229
          %232 = dma.hbm_to_vmem [thread:$0]  %s1, 128, %s230, [#allocation6]
        $region16: #{tpu_custom_call.1} parent=11 // pred_fallthru
          _
        // Predicated region
        $region17: #{tpu_custom_call.1} parent=11 // pred_check
          %p233 = pneg %p106
        $region18: #{tpu_custom_call.1} parent=11 // pred_check_branch
          %235 = sbr.rel (%p233) target = $region20
        $region19: #{tpu_custom_call.1} parent=11 // pred_region
          %s237 = ssub.s32 128, 128
          %238 = vsyncadd [#allocation6], %s237
          %s240 = sshll.u32 [#allocation7], 4
          %s241 = int_to_ptr.vmem [resolvable:$true] %s240
          %243 = dma.hbm_to_vmem [thread:$0]  %s2, 128, %s241, [#allocation6]
        $region20: #{tpu_custom_call.1} parent=11 // pred_fallthru
          _
        // Predicated region
        $region21: #{tpu_custom_call.1} parent=11 // pred_check
          %p244 = pneg %p127
        $region22: #{tpu_custom_call.1} parent=11 // pred_check_branch
          %246 = sbr.rel (%p244) target = $region24
        $region23: #{tpu_custom_call.1} parent=11 // pred_region
          %s248 = ssub.s32 256, 256
          %249 = vsyncadd [#allocation9], %s248
          %s250 = sshll.u32 [#allocation8], 4
          %s251 = int_to_ptr.vmem [resolvable:$true] %s250
          %256 = dma.hbm_to_vmem [thread:$0]  %s3, 256, %s251, [#allocation9], 128, 128, 8
        $region24: #{tpu_custom_call.1} parent=11 // pred_fallthru
          _
      $region12: #{tpu_custom_call.1} parent=5 // pred_fallthru
        _
      %p257 = scmp.lt.s32.totalorder %s24, 2
      // Predicated region
      $region25: #{tpu_custom_call.1} parent=5 // pred_check
        %p258 = pneg %p257
      $region26: #{tpu_custom_call.1} parent=5 // pred_check_branch
        %260 = sbr.rel (%p258) target = $region28
      $region27: #{tpu_custom_call.1} parent=5 // pred_region
        // Predicated region
        $region29: #{tpu_custom_call.1} parent=27 // pred_check
          %p261 = pneg %p58
        $region30: #{tpu_custom_call.1} parent=27 // pred_check_branch
          %263 = sbr.rel (%p261) target = $region32
        $region31: #{tpu_custom_call.1} parent=27 // pred_region
          %s264 = sand.u32 %s48, 1
          %s265 = scalar_lea.sflag [#allocation3], %s264
          %s266 = sand.u32 %s48, 1
          %s267 = smul.addr %s266, 16
          %s268 = scalar_lea.vmem [#allocation2], %s267
          %s269 = sadd.s32 %s31, %s32
          %s270 = smul.u32 4, %s269
          %s272 = ssub.s32 256, 256
          %273 = vsyncadd %s265, %s272
          %s274 = smul.addr %s270, 64
          %s275 = scalar_lea.hbm %s0, %s274
          %s277 = sshll.u32 %s268, 4
          %s278 = int_to_ptr.vmem [resolvable:$true] %s277
          %280 = dma.hbm_to_vmem [thread:$0]  %s275, 256, %s278, %s265
        $region32: #{tpu_custom_call.1} parent=27 // pred_fallthru
          _
      $region28: #{tpu_custom_call.1} parent=5 // pred_fallthru
        _
      %p281 = scmp.le.s32.totalorder 1, %s24
      %p282 = scmp.lt.s32.totalorder %s24, 3
      %p283 = pnand %p281, %p282
      %p284 = pneg %p283
      // Predicated region
      $region33: #{tpu_custom_call.1} parent=5 // pred_check
        _
      $region34: #{tpu_custom_call.1} parent=5 // pred_check_branch
        %286 = sbr.rel (%p283) target = $region36
      $region35: #{tpu_custom_call.1} parent=5 // pred_region
        %s287 = ssub.s32 %s24, 1
        %s288 = sand.u32 %s51, 1
        %s289 = scalar_lea.sflag [#allocation3], %s288
        %s290 = sand.u32 %s51, 1
        %s291 = smul.addr %s290, 16
        %s292 = scalar_lea.vmem [#allocation2], %s291
        // Predicated region
        $region37: #{tpu_custom_call.1} parent=35 // pred_check
          %p293 = pneg %p64
        $region38: #{tpu_custom_call.1} parent=35 // pred_check_branch
          %295 = sbr.rel (%p293) target = $region40
        $region39: #{tpu_custom_call.1} parent=35 // pred_region
          %296 = dma.done %s289, 256
        $region40: #{tpu_custom_call.1} parent=35 // pred_fallthru
          _
        // Predicated region
        $region41: #{tpu_custom_call.1} parent=35 // pred_check
          %p297 = pneg %p85
        $region42: #{tpu_custom_call.1} parent=35 // pred_check_branch
          %299 = sbr.rel (%p297) target = $region44
        $region43: #{tpu_custom_call.1} parent=35 // pred_region
          %300 = dma.done [#allocation6], 128
        $region44: #{tpu_custom_call.1} parent=35 // pred_fallthru
          _
        // Predicated region
        $region45: #{tpu_custom_call.1} parent=35 // pred_check
          %p301 = pneg %p106
        $region46: #{tpu_custom_call.1} parent=35 // pred_check_branch
          %303 = sbr.rel (%p301) target = $region48
        $region47: #{tpu_custom_call.1} parent=35 // pred_region
          %304 = dma.done [#allocation6], 128
        $region48: #{tpu_custom_call.1} parent=35 // pred_fallthru
          _
        // Predicated region
        $region49: #{tpu_custom_call.1} parent=35 // pred_check
          %p305 = pneg %p127
        $region50: #{tpu_custom_call.1} parent=35 // pred_check_branch
          %307 = sbr.rel (%p305) target = $region52
        $region51: #{tpu_custom_call.1} parent=35 // pred_region
          %308 = dma.done [#allocation9], 256
        $region52: #{tpu_custom_call.1} parent=35 // pred_fallthru
          _
        %s309 = sand.u32 %s51, 1
        %s310 = scalar_lea.sflag [#allocation3], %s309
        %s311 = sand.u32 %s51, 1
        %s312 = smul.addr %s311, 16
        %s313 = scalar_lea.vmem [#allocation2], %s312
        %p314 = pneg %p64
        %p315 = pneg %p61
        %p316 = pneg %p85
        %p317 = pneg %p82
        %p318 = pneg %p106
        %p319 = pneg %p103
        %p320 = pneg %p127
        %p321 = pneg %p124
        %p322 = pneg %p155
        %p323 = pneg %p152
        %s324 = sand.u32 %s142, 1
        %s325 = scalar_lea.sflag [#allocation4], %s324
        %s326 = sand.u32 %s142, 1
        %s327 = smul.addr %s326, 64
        %s328 = scalar_lea.vmem [#allocation10], %s327
        %p329 = pneg %p181
        %p330 = pneg %p178
        %s331 = sand.u32 %s29, 1
        %s332 = scalar_lea.sflag [#allocation12], %s331
        %s333 = sand.u32 %s168, 1
        %s334 = smul.addr %s333, 16
        %s335 = scalar_lea.vmem [#allocation11], %s334
        %p336 = pneg %p207
        %p337 = pneg %p204
        %s338 = sand.u32 %s29, 1
        %s339 = scalar_lea.sflag [#allocation12], %s338
        %s340 = sand.u32 %s194, 1
        %s341 = smul.addr %s340, 16
        %s342 = scalar_lea.vmem [#allocation13], %s341
        %s343 = sadd.s32 %s33, %s34
        %s344 = smul.u32 4, %s343
        %s345 = sadd.s32 %s33, %s34
        %s346 = smul.u32 4, %s345
        %p347 = scmp.eq.s32.totalorder %s34, 0
        // Predicated region
        $region53: #{tpu_custom_call.1} parent=35 // pred_check
          %p348 = pneg %p347
        $region54: #{tpu_custom_call.1} parent=35 // pred_check_branch
          %350 = sbr.rel (%p348) target = $region56
        $region55: #{tpu_custom_call.1} parent=35 // pred_region
          %vm351 = vcmask 7168
          %352 = vst.msk [vmem:[%s335] sm:$0xff] %vm351, 0.0
          %353 = vst.msk [vmem:[%s335 + $0x8] sm:$0xff] %vm351, 0.0
          %354 = vst.msk [vmem:[%s342] sm:$0xff] %vm351, 0.0
          %355 = vst.msk [vmem:[%s342 + $0x8] sm:$0xff] %vm351, 0.0
        $region56: #{tpu_custom_call.1} parent=35 // pred_fallthru
          _
        %v356 = vld [vmem:[%s292] sm:$0xff]
        %v357 = vld [vmem:[%s292 + $0x8] sm:$0xff]
        %v358 = vld [vmem:[#allocation5] sm:$0xff]
        %v359 = vld [vmem:[#allocation7] sm:$0xff]
        %361 = vset.pattern.permute.xlu0 0
        %362 = vperm.xlu0 %361, %v359
        %v363 = vpop.permute.xlu0 %362
        %v367 = vcombine.high %v356, %v356
        %v368 = vcombine.high %v357, %v357
        %vm369 = vcmask 31744
        %v371 = vsel %vm369, %v358, 0
        %vm373 = vcmask 1043456
        %v374 = vsel %vm373, %v356, 0
        %v376 = vsel %vm373, %v367, 0
        %v378 = vsel %vm373, %v357, 0
        %v380 = vsel %vm373, %v368, 0
        %382 = vmatprep.subr.mxu0 %v376
        %383 = vmatpush1.msra.mxu0 %v374
        %384 = vmatprep.subr.mxu0 0.0
        %385 = vmatpush1.msra.mxu0 0.0
        %386 = vmatprep.subr.mxu0 0.0
        %387 = vmatpush1.msra.mxu0 0.0
        %388 = vmatprep.subr.mxu0 0.0
        %389 = vmatpush1.msra.mxu0 0.0
        %390 = vmatprep.subr.mxu0 0.0
        %391 = vmatpush1.msra.mxu0 0.0
        %392 = vmatprep.subr.mxu0 0.0
        %393 = vmatpush1.msra.mxu0 0.0
        %394 = vmatprep.subr.mxu0 0.0
        %395 = vmatpush1.msra.mxu0 0.0
        %396 = vmatprep.subr.mxu0 0.0
        %397 = vmatpush1.msra.mxu0 0.0
        %398 = vmatprep.subr.mxu0 0.0
        %399 = vmatpush1.msra.mxu0 0.0
        %400 = vmatprep.subr.mxu0 0.0
        %401 = vmatpush1.msra.mxu0 0.0
        %402 = vmatprep.subr.mxu0 0.0
        %403 = vmatpush1.msra.mxu0 0.0
        %404 = vmatprep.subr.mxu0 0.0
        %405 = vmatpush1.msra.mxu0 0.0
        %406 = vmatprep.subr.mxu0 0.0
        %407 = vmatpush1.msra.mxu0 0.0
        %408 = vmatprep.subr.mxu0 0.0
        %409 = vmatpush1.msra.mxu0 0.0
        %410 = vmatprep.subr.mxu0 0.0
        %411 = vmatpush1.msra.mxu0 0.0
        %412 = vmatprep.subr.mxu0 0.0
        %413 = vmatpush1.msra.mxu0 0.0
        %414 = vmatprep.subr.mxu0 0.0
        %415 = vmatpush1.msra.mxu0 0.0
        %416 = vmatprep.subr.mxu0 0.0
        %417 = vmatpush1.msra.mxu0 0.0
        %418 = vmatprep.subr.mxu0 0.0
        %419 = vmatpush1.msra.mxu0 0.0
        %420 = vmatprep.subr.mxu0 0.0
        %421 = vmatpush1.msra.mxu0 0.0
        %422 = vmatprep.subr.mxu0 0.0
        %423 = vmatpush1.msra.mxu0 0.0
        %424 = vmatprep.subr.mxu0 0.0
        %425 = vmatpush1.msra.mxu0 0.0
        %426 = vmatprep.subr.mxu0 0.0
        %427 = vmatpush1.msra.mxu0 0.0
        %428 = vmatprep.subr.mxu0 0.0
        %429 = vmatpush1.msra.mxu0 0.0
        %430 = vmatprep.subr.mxu0 0.0
        %431 = vmatpush1.msra.mxu0 0.0
        %432 = vmatprep.subr.mxu0 0.0
        %433 = vmatpush1.msra.mxu0 0.0
        %434 = vmatprep.subr.mxu0 0.0
        %435 = vmatpush1.msra.mxu0 0.0
        %436 = vmatprep.subr.mxu0 0.0
        %437 = vmatpush1.msra.mxu0 0.0
        %438 = vmatprep.subr.mxu0 0.0
        %439 = vmatpush1.msra.mxu0 0.0
        %440 = vmatprep.subr.mxu0 0.0
        %441 = vmatpush1.msra.mxu0 0.0
        %442 = vmatprep.subr.mxu0 0.0
        %443 = vmatpush1.msra.mxu0 0.0
        %444 = vmatprep.subr.mxu0 0.0
        %445 = vmatpush1.msra.mxu0 0.0
        %446 = vmatprep.mubr.f32.mxu0 0.0
        %447 = vmatmul.mubr.f32.gmra.mrb[0].mxu0 %v371
        %v448 = vpop.f32.mrb[0].mxu0
        %v449 = vadd.f32 %v363, %v448
        %v450 = vpop.f32.mrb[0].mxu0
        %v451 = vadd.f32 %v363, %v450
        %452 = vdwg.mxu0
        %453 = vmatprep.subr.mxu0 %v380
        %454 = vmatpush1.msra.mxu0 %v378
        %455 = vmatprep.subr.mxu0 0.0
        %456 = vmatpush1.msra.mxu0 0.0
        %457 = vmatprep.subr.mxu0 0.0
        %458 = vmatpush1.msra.mxu0 0.0
        %459 = vmatprep.subr.mxu0 0.0
        %460 = vmatpush1.msra.mxu0 0.0
        %461 = vmatprep.subr.mxu0 0.0
        %462 = vmatpush1.msra.mxu0 0.0
        %463 = vmatprep.subr.mxu0 0.0
        %464 = vmatpush1.msra.mxu0 0.0
        %465 = vmatprep.subr.mxu0 0.0
        %466 = vmatpush1.msra.mxu0 0.0
        %467 = vmatprep.subr.mxu0 0.0
        %468 = vmatpush1.msra.mxu0 0.0
        %469 = vmatprep.subr.mxu0 0.0
        %470 = vmatpush1.msra.mxu0 0.0
        %471 = vmatprep.subr.mxu0 0.0
        %472 = vmatpush1.msra.mxu0 0.0
        %473 = vmatprep.subr.mxu0 0.0
        %474 = vmatpush1.msra.mxu0 0.0
        %475 = vmatprep.subr.mxu0 0.0
        %476 = vmatpush1.msra.mxu0 0.0
        %477 = vmatprep.subr.mxu0 0.0
        %478 = vmatpush1.msra.mxu0 0.0
        %479 = vmatprep.subr.mxu0 0.0
        %480 = vmatpush1.msra.mxu0 0.0
        %481 = vmatprep.subr.mxu0 0.0
        %482 = vmatpush1.msra.mxu0 0.0
        %483 = vmatprep.subr.mxu0 0.0
        %484 = vmatpush1.msra.mxu0 0.0
        %485 = vmatprep.subr.mxu0 0.0
        %486 = vmatpush1.msra.mxu0 0.0
        %487 = vmatprep.subr.mxu0 0.0
        %488 = vmatpush1.msra.mxu0 0.0
        %489 = vmatprep.subr.mxu0 0.0
        %490 = vmatpush1.msra.mxu0 0.0
        %491 = vmatprep.subr.mxu0 0.0
        %492 = vmatpush1.msra.mxu0 0.0
        %493 = vmatprep.subr.mxu0 0.0
        %494 = vmatpush1.msra.mxu0 0.0
        %495 = vmatprep.subr.mxu0 0.0
        %496 = vmatpush1.msra.mxu0 0.0
        %497 = vmatprep.subr.mxu0 0.0
        %498 = vmatpush1.msra.mxu0 0.0
        %499 = vmatprep.subr.mxu0 0.0
        %500 = vmatpush1.msra.mxu0 0.0
        %501 = vmatprep.subr.mxu0 0.0
        %502 = vmatpush1.msra.mxu0 0.0
        %503 = vmatprep.subr.mxu0 0.0
        %504 = vmatpush1.msra.mxu0 0.0
        %505 = vmatprep.subr.mxu0 0.0
        %506 = vmatpush1.msra.mxu0 0.0
        %507 = vmatprep.subr.mxu0 0.0
        %508 = vmatpush1.msra.mxu0 0.0
        %509 = vmatprep.subr.mxu0 0.0
        %510 = vmatpush1.msra.mxu0 0.0
        %511 = vmatprep.subr.mxu0 0.0
        %512 = vmatpush1.msra.mxu0 0.0
        %513 = vmatprep.subr.mxu0 0.0
        %514 = vmatpush1.msra.mxu0 0.0
        %515 = vmatprep.subr.mxu0 0.0
        %516 = vmatpush1.msra.mxu0 0.0
        %517 = vmatprep.mubr.f32.mxu0 0.0
        %518 = vmatmul.mubr.f32.gmra.mrb[0].mxu0 %v371
        %v519 = vpop.f32.mrb[0].mxu0
        %v520 = vadd.f32 %v363, %v519
        %v521 = vpop.f32.mrb[0].mxu0
        %v522 = vadd.f32 %v363, %v521
        %523 = vdwg.mxu0
        %vm524 = vcmp.gt.f32.partialorder %v449, 0.0
        %vm525 = vcmp.gt.f32.partialorder %v451, 0.0
        %vm526 = vcmp.gt.f32.partialorder %v520, 0.0
        %vm527 = vcmp.gt.f32.partialorder %v522, 0.0
        %v528 = vmul.f32 %v449, 0.2
        %v529 = vmul.f32 %v451, 0.2
        %v530 = vmul.f32 %v520, 0.2
        %v531 = vmul.f32 %v522, 0.2
        %v532 = vsel %vm524, %v449, %v528
        %v533 = vsel %vm525, %v451, %v529
        %v534 = vsel %vm526, %v520, %v530
        %v535 = vsel %vm527, %v522, %v531
        %v536 = vld [vmem:[#allocation8] sm:$0xff]
        %v537 = vld [vmem:[#allocation8 + $0x8] sm:$0xff]
        %vm538 = vcmask 64512
        %v540 = vsel %vm538, %v536, 0
        %v543 = vsel %vm538, %v537, 0
        %545 = vmatprep.subr.mxu0 %v533
        %546 = vmatpush1.msra.mxu0 %v532
        %547 = vmatprep.subr.mxu0 0.0
        %548 = vmatpush1.msra.mxu0 0.0
        %549 = vmatprep.subr.mxu0 0.0
        %550 = vmatpush1.msra.mxu0 0.0
        %551 = vmatprep.subr.mxu0 0.0
        %552 = vmatpush1.msra.mxu0 0.0
        %553 = vmatprep.subr.mxu0 0.0
        %554 = vmatpush1.msra.mxu0 0.0
        %555 = vmatprep.subr.mxu0 0.0
        %556 = vmatpush1.msra.mxu0 0.0
        %557 = vmatprep.subr.mxu0 0.0
        %558 = vmatpush1.msra.mxu0 0.0
        %559 = vmatprep.subr.mxu0 0.0
        %560 = vmatpush1.msra.mxu0 0.0
        %561 = vmatprep.subr.mxu0 0.0
        %562 = vmatpush1.msra.mxu0 0.0
        %563 = vmatprep.subr.mxu0 0.0
        %564 = vmatpush1.msra.mxu0 0.0
        %565 = vmatprep.subr.mxu0 0.0
        %566 = vmatpush1.msra.mxu0 0.0
        %567 = vmatprep.subr.mxu0 0.0
        %568 = vmatpush1.msra.mxu0 0.0
        %569 = vmatprep.subr.mxu0 0.0
        %570 = vmatpush1.msra.mxu0 0.0
        %571 = vmatprep.subr.mxu0 0.0
        %572 = vmatpush1.msra.mxu0 0.0
        %573 = vmatprep.subr.mxu0 0.0
        %574 = vmatpush1.msra.mxu0 0.0
        %575 = vmatprep.subr.mxu0 0.0
        %576 = vmatpush1.msra.mxu0 0.0
        %577 = vmatprep.subr.mxu0 0.0
        %578 = vmatpush1.msra.mxu0 0.0
        %579 = vmatprep.subr.mxu0 0.0
        %580 = vmatpush1.msra.mxu0 0.0
        %581 = vmatprep.subr.mxu0 0.0
        %582 = vmatpush1.msra.mxu0 0.0
        %583 = vmatprep.subr.mxu0 0.0
        %584 = vmatpush1.msra.mxu0 0.0
        %585 = vmatprep.subr.mxu0 0.0
        %586 = vmatpush1.msra.mxu0 0.0
        %587 = vmatprep.subr.mxu0 0.0
        %588 = vmatpush1.msra.mxu0 0.0
        %589 = vmatprep.subr.mxu0 0.0
        %590 = vmatpush1.msra.mxu0 0.0
        %591 = vmatprep.subr.mxu0 0.0
        %592 = vmatpush1.msra.mxu0 0.0
        %593 = vmatprep.subr.mxu0 0.0
        %594 = vmatpush1.msra.mxu0 0.0
        %595 = vmatprep.subr.mxu0 0.0
        %596 = vmatpush1.msra.mxu0 0.0
        %597 = vmatprep.subr.mxu0 0.0
        %598 = vmatpush1.msra.mxu0 0.0
        %599 = vmatprep.subr.mxu0 0.0
        %600 = vmatpush1.msra.mxu0 0.0
        %601 = vmatprep.subr.mxu0 0.0
        %602 = vmatpush1.msra.mxu0 0.0
        %603 = vmatprep.subr.mxu0 0.0
        %604 = vmatpush1.msra.mxu0 0.0
        %605 = vmatprep.subr.mxu0 0.0
        %606 = vmatpush1.msra.mxu0 0.0
        %607 = vmatprep.subr.mxu0 0.0
        %608 = vmatpush1.msra.mxu0 0.0
        %609 = vmatprep.mubr.f32.mxu0 0.0
        %610 = vmatmul.mubr.f32.gmra.mrb[0].mxu0 %v540
        %v611 = vpop.f32.mrb[0].mxu0
        %v612 = vadd.f32 0.0, %v611
        %v613 = vpop.f32.mrb[0].mxu0
        %v614 = vadd.f32 0.0, %v613
        %615 = vmatprep.mubr.f32.mxu0 0.0
        %616 = vmatmul.mubr.f32.gmra.mrb[0].mxu0 %v543
        %v617 = vpop.f32.mrb[0].mxu0
        %v618 = vadd.f32 0.0, %v617
        %v619 = vpop.f32.mrb[0].mxu0
        %v620 = vadd.f32 0.0, %v619
        %621 = vdwg.mxu0
        %622 = vmatprep.subr.mxu0 %v535
        %623 = vmatpush1.msra.mxu0 %v534
        %624 = vmatprep.subr.mxu0 0.0
        %625 = vmatpush1.msra.mxu0 0.0
        %626 = vmatprep.subr.mxu0 0.0
        %627 = vmatpush1.msra.mxu0 0.0
        %628 = vmatprep.subr.mxu0 0.0
        %629 = vmatpush1.msra.mxu0 0.0
        %630 = vmatprep.subr.mxu0 0.0
        %631 = vmatpush1.msra.mxu0 0.0
        %632 = vmatprep.subr.mxu0 0.0
        %633 = vmatpush1.msra.mxu0 0.0
        %634 = vmatprep.subr.mxu0 0.0
        %635 = vmatpush1.msra.mxu0 0.0
        %636 = vmatprep.subr.mxu0 0.0
        %637 = vmatpush1.msra.mxu0 0.0
        %638 = vmatprep.subr.mxu0 0.0
        %639 = vmatpush1.msra.mxu0 0.0
        %640 = vmatprep.subr.mxu0 0.0
        %641 = vmatpush1.msra.mxu0 0.0
        %642 = vmatprep.subr.mxu0 0.0
        %643 = vmatpush1.msra.mxu0 0.0
        %644 = vmatprep.subr.mxu0 0.0
        %645 = vmatpush1.msra.mxu0 0.0
        %646 = vmatprep.subr.mxu0 0.0
        %647 = vmatpush1.msra.mxu0 0.0
        %648 = vmatprep.subr.mxu0 0.0
        %649 = vmatpush1.msra.mxu0 0.0
        %650 = vmatprep.subr.mxu0 0.0
        %651 = vmatpush1.msra.mxu0 0.0
        %652 = vmatprep.subr.mxu0 0.0
        %653 = vmatpush1.msra.mxu0 0.0
        %654 = vmatprep.subr.mxu0 0.0
        %655 = vmatpush1.msra.mxu0 0.0
        %656 = vmatprep.subr.mxu0 0.0
        %657 = vmatpush1.msra.mxu0 0.0
        %658 = vmatprep.subr.mxu0 0.0
        %659 = vmatpush1.msra.mxu0 0.0
        %660 = vmatprep.subr.mxu0 0.0
        %661 = vmatpush1.msra.mxu0 0.0
        %662 = vmatprep.subr.mxu0 0.0
        %663 = vmatpush1.msra.mxu0 0.0
        %664 = vmatprep.subr.mxu0 0.0
        %665 = vmatpush1.msra.mxu0 0.0
        %666 = vmatprep.subr.mxu0 0.0
        %667 = vmatpush1.msra.mxu0 0.0
        %668 = vmatprep.subr.mxu0 0.0
        %669 = vmatpush1.msra.mxu0 0.0
        %670 = vmatprep.subr.mxu0 0.0
        %671 = vmatpush1.msra.mxu0 0.0
        %672 = vmatprep.subr.mxu0 0.0
        %673 = vmatpush1.msra.mxu0 0.0
        %674 = vmatprep.subr.mxu0 0.0
        %675 = vmatpush1.msra.mxu0 0.0
        %676 = vmatprep.subr.mxu0 0.0
        %677 = vmatpush1.msra.mxu0 0.0
        %678 = vmatprep.subr.mxu0 0.0
        %679 = vmatpush1.msra.mxu0 0.0
        %680 = vmatprep.subr.mxu0 0.0
        %681 = vmatpush1.msra.mxu0 0.0
        %682 = vmatprep.subr.mxu0 0.0
        %683 = vmatpush1.msra.mxu0 0.0
        %684 = vmatprep.subr.mxu0 0.0
        %685 = vmatpush1.msra.mxu0 0.0
        %686 = vmatprep.mubr.f32.mxu0 0.0
        %687 = vmatmul.mubr.f32.gmra.mrb[0].mxu0 %v540
        %v688 = vpop.f32.mrb[0].mxu0
        %v689 = vadd.f32 0.0, %v688
        %v690 = vpop.f32.mrb[0].mxu0
        %v691 = vadd.f32 0.0, %v690
        %692 = vmatprep.mubr.f32.mxu0 0.0
        %693 = vmatmul.mubr.f32.gmra.mrb[0].mxu0 %v543
        %v694 = vpop.f32.mrb[0].mxu0
        %v695 = vadd.f32 0.0, %v694
        %v696 = vpop.f32.mrb[0].mxu0
        %v697 = vadd.f32 0.0, %v696
        %698 = vdwg.mxu0
        %699 = vst [vmem:[%s328] sm:$0xff] %v612
        %700 = vst [vmem:[%s328 + $0x8] sm:$0xff] %v614
        %701 = vst [vmem:[%s328 + $0x10] sm:$0xff] %v689
        %702 = vst [vmem:[%s328 + $0x18] sm:$0xff] %v691
        %703 = vst [vmem:[%s328 + $0x20] sm:$0xff] %v618
        %704 = vst [vmem:[%s328 + $0x28] sm:$0xff] %v620
        %705 = vst [vmem:[%s328 + $0x30] sm:$0xff] %v695
        %706 = vst [vmem:[%s328 + $0x38] sm:$0xff] %v697
        %v707 = vld [vmem:[%s335] sm:$0xff]
        %v708 = vld [vmem:[%s335 + $0x8] sm:$0xff]
        %v709 = vadd.f32 %v612, %v614
        %v710 = vadd.f32 %v709, %v689
        %v711 = vadd.f32 %v710, %v691
        %712 = vadd.xlane.f32.xlu0 %v711
        %v713 = vpop.xlane.xlu0 %712
        %v714 = vadd.f32 %v618, %v620
        %v715 = vadd.f32 %v714, %v695
        %v716 = vadd.f32 %v715, %v697
        %717 = vadd.xlane.f32.xlu0 %v716
        %v718 = vpop.xlane.xlu0 %717
        %v719 = vadd.f32 %v707, %v713
        %v720 = vadd.f32 %v708, %v718
        %vm721 = vcmask 7168
        %722 = vst.msk [vmem:[%s335] sm:$0xff] %vm721, %v719
        %723 = vst.msk [vmem:[%s335 + $0x8] sm:$0xff] %vm721, %v720
        %v724 = vld [vmem:[%s342] sm:$0xff]
        %v725 = vld [vmem:[%s342 + $0x8] sm:$0xff]
        %v726 = vmul.f32 %v612, %v612
        %v727 = vmul.f32 %v614, %v614
        %v728 = vmul.f32 %v689, %v689
        %v729 = vmul.f32 %v691, %v691
        %v730 = vmul.f32 %v618, %v618
        %v731 = vmul.f32 %v620, %v620
        %v732 = vmul.f32 %v695, %v695
        %v733 = vmul.f32 %v697, %v697
        %v734 = vadd.f32 %v726, %v727
        %v735 = vadd.f32 %v734, %v728
        %v736 = vadd.f32 %v735, %v729
        %737 = vadd.xlane.f32.xlu0 %v736
        %v738 = vpop.xlane.xlu0 %737
        %v739 = vadd.f32 %v730, %v731
        %v740 = vadd.f32 %v739, %v732
        %v741 = vadd.f32 %v740, %v733
        %742 = vadd.xlane.f32.xlu0 %v741
        %v743 = vpop.xlane.xlu0 %742
        %v744 = vadd.f32 %v724, %v738
        %v745 = vadd.f32 %v725, %v743
        %746 = vst.msk [vmem:[%s342] sm:$0xff] %vm721, %v744
        %747 = vst.msk [vmem:[%s342 + $0x8] sm:$0xff] %vm721, %v745
        %s748 = sand.u32 %s142, 1
        %s749 = scalar_lea.sflag [#allocation4], %s748
        %s750 = sand.u32 %s142, 1
        %s751 = smul.addr %s750, 64
        %s752 = scalar_lea.vmem [#allocation10], %s751
        %s753 = sand.u32 %s29, 1
        %s754 = scalar_lea.sflag [#allocation12], %s753
        %s755 = sand.u32 %s168, 1
        %s756 = smul.addr %s755, 16
        %s757 = scalar_lea.vmem [#allocation11], %s756
        %s758 = sand.u32 %s29, 1
        %s759 = scalar_lea.sflag [#allocation12], %s758
        %s760 = sand.u32 %s194, 1
        %s761 = smul.addr %s760, 16
        %s762 = scalar_lea.vmem [#allocation13], %s761
        // Predicated region
        $region57: #{tpu_custom_call.1} parent=35 // pred_check
          %p763 = pneg %p152
        $region58: #{tpu_custom_call.1} parent=35 // pred_check_branch
          %765 = sbr.rel (%p763) target = $region60
        $region59: #{tpu_custom_call.1} parent=35 // pred_region
          %s766 = sadd.s32 %s33, %s34
          %s767 = smul.u32 4, %s766
          %s769 = ssub.s32 1024, 1024
          %770 = vsyncadd %s749, %s769
          %s771 = smul.addr %s767, 128
          %s772 = scalar_lea.hbm %s4, %s771
          %s773 = sshll.u32 %s752, 4
          %s774 = int_to_ptr.vmem [resolvable:$true] %s773
          %779 = dma.vmem_to_hbm [thread:$0]  %s774, 1024, %s772, %s749, 512, 1024, 32
        $region60: #{tpu_custom_call.1} parent=35 // pred_fallthru
          _
        // Predicated region
        $region61: #{tpu_custom_call.1} parent=35 // pred_check
          %p780 = pneg %p178
        $region62: #{tpu_custom_call.1} parent=35 // pred_check_branch
          %782 = sbr.rel (%p780) target = $region64
        $region63: #{tpu_custom_call.1} parent=35 // pred_region
          %s784 = ssub.s32 256, 256
          %785 = vsyncadd %s754, %s784
          %s786 = smul.addr %s33, 2
          %s787 = smul.addr %s786, 128
          %s788 = scalar_lea.hbm %s5, %s787
          %s789 = sshll.u32 %s757, 4
          %s790 = int_to_ptr.vmem [resolvable:$true] %s789
          %795 = dma.vmem_to_hbm [thread:$0]  %s790, 256, %s788, %s754, 128, 128, 8
        $region64: #{tpu_custom_call.1} parent=35 // pred_fallthru
          _
        // Predicated region
        $region65: #{tpu_custom_call.1} parent=35 // pred_check
          %p796 = pneg %p204
        $region66: #{tpu_custom_call.1} parent=35 // pred_check_branch
          %798 = sbr.rel (%p796) target = $region68
        $region67: #{tpu_custom_call.1} parent=35 // pred_region
          %s800 = ssub.s32 256, 256
          %801 = vsyncadd %s759, %s800
          %s802 = smul.addr %s33, 2
          %s803 = smul.addr %s802, 128
          %s804 = scalar_lea.hbm %s6, %s803
          %s805 = sshll.u32 %s762, 4
          %s806 = int_to_ptr.vmem [resolvable:$true] %s805
          %811 = dma.vmem_to_hbm [thread:$0]  %s806, 256, %s804, %s759, 128, 128, 8
        $region68: #{tpu_custom_call.1} parent=35 // pred_fallthru
          _
      $region36: #{tpu_custom_call.1} parent=5 // pred_fallthru
        _
      %p812 = scmp.le.s32.totalorder 2, %s24
      // Predicated region
      $region69: #{tpu_custom_call.1} parent=5 // pred_check
        %p813 = pneg %p812
      $region70: #{tpu_custom_call.1} parent=5 // pred_check_branch
        %815 = sbr.rel (%p813) target = $region72
      $region71: #{tpu_custom_call.1} parent=5 // pred_region
        %s816 = ssub.s32 %s24, 2
        // Predicated region
        $region73: #{tpu_custom_call.1} parent=71 // pred_check
          %p817 = pneg %p158
        $region74: #{tpu_custom_call.1} parent=71 // pred_check_branch
          %819 = sbr.rel (%p817) target = $region76
        $region75: #{tpu_custom_call.1} parent=71 // pred_region
          %s820 = sand.u32 %s143, 1
          %s821 = scalar_lea.sflag [#allocation4], %s820
          %s822 = sand.u32 %s143, 1
          %s823 = smul.addr %s822, 64
          %s824 = scalar_lea.vmem [#allocation10], %s823
          %825 = dma.done %s821, 1024
        $region76: #{tpu_custom_call.1} parent=71 // pred_fallthru
          _
        // Predicated region
        $region77: #{tpu_custom_call.1} parent=71 // pred_check
          %p826 = pneg %p184
        $region78: #{tpu_custom_call.1} parent=71 // pred_check_branch
          %828 = sbr.rel (%p826) target = $region80
        $region79: #{tpu_custom_call.1} parent=71 // pred_region
          %s829 = sand.u32 %s30, 1
          %s830 = scalar_lea.sflag [#allocation12], %s829
          %s831 = sand.u32 %s169, 1
          %s832 = smul.addr %s831, 16
          %s833 = scalar_lea.vmem [#allocation11], %s832
          %834 = dma.done %s830, 256
        $region80: #{tpu_custom_call.1} parent=71 // pred_fallthru
          _
        // Predicated region
        $region81: #{tpu_custom_call.1} parent=71 // pred_check
          %p835 = pneg %p210
        $region82: #{tpu_custom_call.1} parent=71 // pred_check_branch
          %837 = sbr.rel (%p835) target = $region84
        $region83: #{tpu_custom_call.1} parent=71 // pred_region
          %s838 = sand.u32 %s30, 1
          %s839 = scalar_lea.sflag [#allocation12], %s838
          %s840 = sand.u32 %s195, 1
          %s841 = smul.addr %s840, 16
          %s842 = scalar_lea.vmem [#allocation13], %s841
          %843 = dma.done %s839, 256
        $region84: #{tpu_custom_call.1} parent=71 // pred_fallthru
          _
      $region72: #{tpu_custom_call.1} parent=5 // pred_fallthru
        _
    $region6: #{tpu_custom_call.1} parent=1 // loop_footer
      %s28 = sadd.s32 1, %s24
    $region7: #{tpu_custom_call.1} parent=1 // loop_footer_branch
      %23 = sbr.rel target = $region3
    $region8: #{tpu_custom_call.1} parent=1 // loop_exit
      _
    %844 = vsyncpa [#allocation3], 1
    %s845 = scalar_lea.sflag [#allocation3], 1
    %846 = vsyncpa %s845, 1
    %847 = vsyncpa [#allocation6], 1
    %848 = vsyncpa [#allocation9], 1
    %849 = vsyncpa [#allocation4], 1
    %s850 = scalar_lea.sflag [#allocation4], 1
    %851 = vsyncpa %s850, 1
    %852 = vsyncpa [#allocation12], 1
    %s853 = scalar_lea.sflag [#allocation12], 1
    %854 = vsyncpa %s853, 1

</llo_original>
